<compile_context>
chip_gen: v5e
topology: v5e:2x2
jax: 0.10.0
libtpu: 0.0.40
codegen_flags: <defaults>
</compile_context>

<pallas_src>
import functools

import jax
import jax.numpy as jnp
from jax.experimental import pallas as pl
from jax.experimental.pallas import tpu as pltpu


def _mam_ma_kernel(x_ref, wc_ref, bc_ref, ws_ref, bs_ref, o_ref):
    # x_ref block: (TB, C1, C2) batch tile. Compute in f32 regardless of I/O dtype.
    x = x_ref[...].astype(jnp.float32)

    # ---- AttentionMechanism over C1: pool across C2 (lane axis) ----
    avg1 = jnp.mean(x, axis=2)                                        # (TB, C1)
    max1 = jnp.max(x, axis=2)                                         # (TB, C1)
    # Weights are already transposed: y = v @ W_t + b  (PyTorch Linear).
    a1 = jnp.dot(avg1, wc_ref[0], preferred_element_type=jnp.float32) + bc_ref[0]
    m1 = jnp.dot(max1, wc_ref[1], preferred_element_type=jnp.float32) + bc_ref[1]
    ca = jax.nn.sigmoid(jnp.maximum(a1, 0.0) + jnp.maximum(m1, 0.0))  # (TB, C1)

    out_ca = x * ca[:, :, None]                                       # (TB, C1, C2)

    # ---- AttentionMechanism over C2: pool across C1 (sublane axis) ----
    avg2 = jnp.mean(out_ca, axis=1)                                   # (TB, C2)
    max2 = jnp.max(out_ca, axis=1)                                    # (TB, C2)
    a2 = jnp.dot(avg2, ws_ref[0], preferred_element_type=jnp.float32) + bs_ref[0]
    m2 = jnp.dot(max2, ws_ref[1], preferred_element_type=jnp.float32) + bs_ref[1]
    sa = jax.nn.sigmoid(jnp.maximum(a2, 0.0) + jnp.maximum(m2, 0.0))  # (TB, C2)

    # (out_ca.T * sa.T).T == out_ca * sa  -> equals PyTorch permute/scale/permute.
    o_ref[...] = (out_ca * sa[:, None, :]).astype(o_ref.dtype)


def _pack_params(params):
    """Pre-transpose Linear weights and stack both branches per attention."""
    wc = jnp.stack([params["ca_fc1_w"].T, params["ca_fc2_w"].T])   # (2, C1, C1)
    bc = jnp.stack([params["ca_fc1_b"], params["ca_fc2_b"]])       # (2, 1, C1)
    ws = jnp.stack([params["sa_fc1_w"].T, params["sa_fc2_w"].T])   # (2, C2, C2)
    bs = jnp.stack([params["sa_fc1_b"], params["sa_fc2_b"]])       # (2, 1, C2)
    return wc, bc, ws, bs


def _choose_batch_tile(B, C1, C2, itemsize, vmem_budget_bytes=24 << 20):
    """Largest MXU-friendly batch tile that keeps double-buffered I/O in VMEM."""
    per_batch = C1 * C2 * max(itemsize, 4)          # kernel upcasts to f32
    cap = max(1, vmem_budget_bytes // (4 * per_batch))   # 2 bufs x (in + out)
    tb = min(B, 256, cap)                           # 256 rows feeds v6e/v7x MXU
    if tb >= 8:
        tb = (tb // 8) * 8                          # sublane alignment
    return max(1, tb)


@functools.partial(jax.jit, static_argnames=("batch_tile",))
def mam_ma(x, params, *, batch_tile=None):
    """x: (B, C1, C2). params: dict of the four fc weights/biases."""
    B, C1, C2 = x.shape
    tb = batch_tile or _choose_batch_tile(B, C1, C2, x.dtype.itemsize)
    tb = max(1, min(tb, B))
    wc, bc, ws, bs = _pack_params(params)

    def _invariant(shape):
        return pl.BlockSpec(shape, lambda b: (0,) * len(shape))

    return pl.pallas_call(
        _mam_ma_kernel,
        out_shape=jax.ShapeDtypeStruct((B, C1, C2), x.dtype),
        grid_spec=pltpu.PrefetchScalarGridSpec(
            num_scalar_prefetch=0,
            grid=(pl.cdiv(B, tb),),
            in_specs=[
                pl.BlockSpec((tb, C1, C2), lambda b: (b, 0, 0)),   # x batch tile
                _invariant((2, C1, C1)), _invariant((2, 1, C1)),   # ca fc1/fc2
                _invariant((2, C2, C2)), _invariant((2, 1, C2)),   # sa fc1/fc2
            ],
            out_specs=pl.BlockSpec((tb, C1, C2), lambda b: (b, 0, 0)),
        ),
        compiler_params=pltpu.CompilerParams(
            dimension_semantics=("parallel",)),
    )(x, wc, bc, ws, bs)


def mam_ma_reference(x, params):
    """Pure-JAX reference mirroring the PyTorch forward exactly."""
    def attn(v, w1, b1, w2, b2):
        # v: (B, C, L); AttentionMechanism.forward
        avg = jnp.mean(v, axis=2)                     # AdaptiveAvgPool1d(1)
        mx = jnp.max(v, axis=2)                       # AdaptiveMaxPool1d(1)
        a = jax.nn.relu(avg @ w1.T + b1[0])
        m = jax.nn.relu(mx @ w2.T + b2[0])
        return jax.nn.sigmoid(a + m)[:, :, None]      # (B, C, 1)

    ca = attn(x, params["ca_fc1_w"], params["ca_fc1_b"],
              params["ca_fc2_w"], params["ca_fc2_b"])
    out_ca = x * ca
    out_ca_t = jnp.transpose(out_ca, (0, 2, 1))
    sa = attn(out_ca_t, params["sa_fc1_w"], params["sa_fc1_b"],
              params["sa_fc2_w"], params["sa_fc2_b"])
    out_sa = out_ca_t * sa
    return jnp.transpose(out_sa, (0, 2, 1))


def init_params(key, c1, c2):
    """Deterministic init mimicking nn.Linear default (uniform +-1/sqrt(fan_in))."""
    ks = jax.random.split(key, 8)

    def lin(kw, kb, n):
        bound = 1.0 / jnp.sqrt(n)
        w = jax.random.uniform(kw, (n, n), jnp.float32, -bound, bound)
        b = jax.random.uniform(kb, (1, n), jnp.float32, -bound, bound)
        return w, b

    p = {}
    p["ca_fc1_w"], p["ca_fc1_b"] = lin(ks[0], ks[1], c1)
    p["ca_fc2_w"], p["ca_fc2_b"] = lin(ks[2], ks[3], c1)
    p["sa_fc1_w"], p["sa_fc1_b"] = lin(ks[4], ks[5], c2)
    p["sa_fc2_w"], p["sa_fc2_b"] = lin(ks[6], ks[7], c2)
    return p


if __name__ == "__main__":
    B, C1, C2 = 16, 16, 32   # x: (batch, inplane1, inplane2)
    key = jax.random.PRNGKey(0)
    kx, kp = jax.random.split(key)
    x = jax.random.normal(kx, (B, C1, C2), jnp.float32)
    params = init_params(kp, C1, C2)

    # f32 path; force 2 grid steps to exercise the batch-tiled pipeline.
    out = jax.block_until_ready(mam_ma(x, params, batch_tile=8))
    ref = mam_ma_reference(x, params)
    assert out.shape == (B, C1, C2)
    assert jnp.allclose(out, ref, atol=1e-5, rtol=1e-5), "f32 mismatch vs reference"

    # bf16 HBM I/O path (compute stays f32 inside the kernel).
    x_bf16 = x.astype(jnp.bfloat16)
    out_bf16 = jax.block_until_ready(mam_ma(x_bf16, params, batch_tile=8))
    ref_bf16 = mam_ma_reference(x_bf16.astype(jnp.float32), params)
    assert out_bf16.dtype == jnp.bfloat16
    assert jnp.allclose(out_bf16.astype(jnp.float32), ref_bf16,
                        atol=5e-2, rtol=5e-2), "bf16 mismatch vs reference"

    print("KERNEL_OK")
</pallas_src>

<mosaic_0001>
module attributes {stable_mosaic.version = 11 : i64} {
  func.func @_mam_ma_kernel(%arg0: i32, %arg1: memref<8x16x32xf32, #tpu.memory_space<vmem>>, %arg2: memref<2x16x16xf32, #tpu.memory_space<vmem>>, %arg3: memref<2x1x16xf32, #tpu.memory_space<vmem>>, %arg4: memref<2x32x32xf32, #tpu.memory_space<vmem>>, %arg5: memref<2x1x32xf32, #tpu.memory_space<vmem>>, %arg6: memref<8x16x32xf32, #tpu.memory_space<vmem>>) attributes {dimension_semantics = [#tpu.dimension_semantics<parallel>], iteration_bounds = array<i64: 2>, scalar_prefetch = 0 : i64, scratch_operands = 0 : i64, tpu.core_type = #tpu.core_type<tc>, window_params = [{transform_indices = @transform_0, window_bounds = array<i64: 8, 16, 32>}, {pipeline_mode = #tpu.pipeline_mode<synchronous>, transform_indices = @transform_1, window_bounds = array<i64: 2, 16, 16>}, {pipeline_mode = #tpu.pipeline_mode<synchronous>, transform_indices = @transform_2, window_bounds = array<i64: 2, 1, 16>}, {pipeline_mode = #tpu.pipeline_mode<synchronous>, transform_indices = @transform_3, window_bounds = array<i64: 2, 32, 32>}, {pipeline_mode = #tpu.pipeline_mode<synchronous>, transform_indices = @transform_4, window_bounds = array<i64: 2, 1, 32>}, {transform_indices = @transform_5, window_bounds = array<i64: 8, 16, 32>}]} {
    %c0 = arith.constant 0 : index
    %c0_0 = arith.constant 0 : index
    %c0_1 = arith.constant 0 : index
    %0 = vector.load %arg1[%c0, %c0_0, %c0_1] : memref<8x16x32xf32, #tpu.memory_space<vmem>>, vector<8x16x32xf32>
    %cst = arith.constant dense<0.000000e+00> : vector<8x16xf32>
    %1 = vector.multi_reduction <add>, %0, %cst [2] : vector<8x16x32xf32> to vector<8x16xf32>
    %cst_2 = arith.constant 3.200000e+01 : f32
    %2 = vector.broadcast %cst_2 : f32 to vector<8x16xf32>
    %3 = arith.divf %1, %2 : vector<8x16xf32>
    %cst_3 = arith.constant dense<0xFF800000> : vector<8x16xf32>
    %4 = vector.multi_reduction <maximumf>, %0, %cst_3 [2] : vector<8x16x32xf32> to vector<8x16xf32>
    %c0_4 = arith.constant 0 : index
    %c0_5 = arith.constant 0 : index
    %c0_6 = arith.constant 0 : index
    %5 = vector.load %arg2[%c0_4, %c0_5, %c0_6] : memref<2x16x16xf32, #tpu.memory_space<vmem>>, vector<1x16x16xf32>
    %6 = vector.shape_cast %5 : vector<1x16x16xf32> to vector<16x16xf32>
    %cst_7 = arith.constant dense<0.000000e+00> : vector<8x16xf32>
    %7 = tpu.matmul %3, %6, %cst_7 {dimension_numbers = #tpu.dot_dimension_numbers<[1], [0], [0], [1], [0, 0, 1, 1], [], []>} : vector<8x16xf32>, vector<16x16xf32>, vector<8x16xf32> -> vector<8x16xf32>
    %c0_8 = arith.constant 0 : index
    %c0_9 = arith.constant 0 : index
    %c0_10 = arith.constant 0 : index
    %8 = vector.load %arg3[%c0_8, %c0_9, %c0_10] : memref<2x1x16xf32, #tpu.memory_space<vmem>>, vector<1x1x16xf32>
    %9 = vector.shape_cast %8 : vector<1x1x16xf32> to vector<1x16xf32>
    %10 = vector.broadcast %9 : vector<1x16xf32> to vector<8x16xf32>
    %11 = arith.addf %7, %10 : vector<8x16xf32>
    %c1 = arith.constant 1 : index
    %c0_11 = arith.constant 0 : index
    %c0_12 = arith.constant 0 : index
    %12 = vector.load %arg2[%c1, %c0_11, %c0_12] : memref<2x16x16xf32, #tpu.memory_space<vmem>>, vector<1x16x16xf32>
    %13 = vector.shape_cast %12 : vector<1x16x16xf32> to vector<16x16xf32>
    %cst_13 = arith.constant dense<0.000000e+00> : vector<8x16xf32>
    %14 = tpu.matmul %4, %13, %cst_13 {dimension_numbers = #tpu.dot_dimension_numbers<[1], [0], [0], [1], [0, 0, 1, 1], [], []>} : vector<8x16xf32>, vector<16x16xf32>, vector<8x16xf32> -> vector<8x16xf32>
    %c1_14 = arith.constant 1 : index
    %c0_15 = arith.constant 0 : index
    %c0_16 = arith.constant 0 : index
    %15 = vector.load %arg3[%c1_14, %c0_15, %c0_16] : memref<2x1x16xf32, #tpu.memory_space<vmem>>, vector<1x1x16xf32>
    %16 = vector.shape_cast %15 : vector<1x1x16xf32> to vector<1x16xf32>
    %17 = vector.broadcast %16 : vector<1x16xf32> to vector<8x16xf32>
    %18 = arith.addf %14, %17 : vector<8x16xf32>
    %cst_17 = arith.constant 0.000000e+00 : f32
    %19 = vector.broadcast %cst_17 : f32 to vector<8x16xf32>
    %20 = arith.maximumf %11, %19 : vector<8x16xf32>
    %cst_18 = arith.constant 0.000000e+00 : f32
    %21 = vector.broadcast %cst_18 : f32 to vector<8x16xf32>
    %22 = arith.maximumf %18, %21 : vector<8x16xf32>
    %23 = arith.addf %20, %22 : vector<8x16xf32>
    %24 = arith.negf %23 : vector<8x16xf32>
    %25 = math.exp %24 : vector<8x16xf32>
    %cst_19 = arith.constant 1.000000e+00 : f32
    %26 = vector.broadcast %cst_19 : f32 to vector<8x16xf32>
    %27 = arith.addf %26, %25 : vector<8x16xf32>
    %28 = arith.divf %26, %27 : vector<8x16xf32>
    %29 = vector.shape_cast %28 : vector<8x16xf32> to vector<8x16x1xf32>
    %30 = vector.broadcast %29 : vector<8x16x1xf32> to vector<8x16x32xf32>
    %31 = arith.mulf %0, %30 : vector<8x16x32xf32>
    %cst_20 = arith.constant dense<0.000000e+00> : vector<8x32xf32>
    %32 = vector.multi_reduction <add>, %31, %cst_20 [1] : vector<8x16x32xf32> to vector<8x32xf32>
    %cst_21 = arith.constant 1.600000e+01 : f32
    %33 = vector.broadcast %cst_21 : f32 to vector<8x32xf32>
    %34 = arith.divf %32, %33 : vector<8x32xf32>
    %cst_22 = arith.constant dense<0xFF800000> : vector<8x32xf32>
    %35 = vector.multi_reduction <maximumf>, %31, %cst_22 [1] : vector<8x16x32xf32> to vector<8x32xf32>
    %c0_23 = arith.constant 0 : index
    %c0_24 = arith.constant 0 : index
    %c0_25 = arith.constant 0 : index
    %36 = vector.load %arg4[%c0_23, %c0_24, %c0_25] : memref<2x32x32xf32, #tpu.memory_space<vmem>>, vector<1x32x32xf32>
    %37 = vector.shape_cast %36 : vector<1x32x32xf32> to vector<32x32xf32>
    %cst_26 = arith.constant dense<0.000000e+00> : vector<8x32xf32>
    %38 = tpu.matmul %34, %37, %cst_26 {dimension_numbers = #tpu.dot_dimension_numbers<[1], [0], [0], [1], [0, 0, 1, 1], [], []>} : vector<8x32xf32>, vector<32x32xf32>, vector<8x32xf32> -> vector<8x32xf32>
    %c0_27 = arith.constant 0 : index
    %c0_28 = arith.constant 0 : index
    %c0_29 = arith.constant 0 : index
    %39 = vector.load %arg5[%c0_27, %c0_28, %c0_29] : memref<2x1x32xf32, #tpu.memory_space<vmem>>, vector<1x1x32xf32>
    %40 = vector.shape_cast %39 : vector<1x1x32xf32> to vector<1x32xf32>
    %41 = vector.broadcast %40 : vector<1x32xf32> to vector<8x32xf32>
    %42 = arith.addf %38, %41 : vector<8x32xf32>
    %c1_30 = arith.constant 1 : index
    %c0_31 = arith.constant 0 : index
    %c0_32 = arith.constant 0 : index
    %43 = vector.load %arg4[%c1_30, %c0_31, %c0_32] : memref<2x32x32xf32, #tpu.memory_space<vmem>>, vector<1x32x32xf32>
    %44 = vector.shape_cast %43 : vector<1x32x32xf32> to vector<32x32xf32>
    %cst_33 = arith.constant dense<0.000000e+00> : vector<8x32xf32>
    %45 = tpu.matmul %35, %44, %cst_33 {dimension_numbers = #tpu.dot_dimension_numbers<[1], [0], [0], [1], [0, 0, 1, 1], [], []>} : vector<8x32xf32>, vector<32x32xf32>, vector<8x32xf32> -> vector<8x32xf32>
    %c1_34 = arith.constant 1 : index
    %c0_35 = arith.constant 0 : index
    %c0_36 = arith.constant 0 : index
    %46 = vector.load %arg5[%c1_34, %c0_35, %c0_36] : memref<2x1x32xf32, #tpu.memory_space<vmem>>, vector<1x1x32xf32>
    %47 = vector.shape_cast %46 : vector<1x1x32xf32> to vector<1x32xf32>
    %48 = vector.broadcast %47 : vector<1x32xf32> to vector<8x32xf32>
    %49 = arith.addf %45, %48 : vector<8x32xf32>
    %cst_37 = arith.constant 0.000000e+00 : f32
    %50 = vector.broadcast %cst_37 : f32 to vector<8x32xf32>
    %51 = arith.maximumf %42, %50 : vector<8x32xf32>
    %cst_38 = arith.constant 0.000000e+00 : f32
    %52 = vector.broadcast %cst_38 : f32 to vector<8x32xf32>
    %53 = arith.maximumf %49, %52 : vector<8x32xf32>
    %54 = arith.addf %51, %53 : vector<8x32xf32>
    %55 = arith.negf %54 : vector<8x32xf32>
    %56 = math.exp %55 : vector<8x32xf32>
    %cst_39 = arith.constant 1.000000e+00 : f32
    %57 = vector.broadcast %cst_39 : f32 to vector<8x32xf32>
    %58 = arith.addf %57, %56 : vector<8x32xf32>
    %59 = arith.divf %57, %58 : vector<8x32xf32>
    %60 = vector.shape_cast %59 : vector<8x32xf32> to vector<8x1x32xf32>
    %61 = vector.broadcast %60 : vector<8x1x32xf32> to vector<8x16x32xf32>
    %62 = arith.mulf %31, %61 : vector<8x16x32xf32>
    %c0_40 = arith.constant 0 : index
    %c0_41 = arith.constant 0 : index
    %c0_42 = arith.constant 0 : index
    %63 = vector.load %arg6[%c0_40, %c0_41, %c0_42] : memref<8x16x32xf32, #tpu.memory_space<vmem>>, vector<8x16x32xf32>
    tpu.vector_store %arg6[%c0_40, %c0_41, %c0_42], %62 {strides = array<i32>} : memref<8x16x32xf32, #tpu.memory_space<vmem>>, vector<8x16x32xf32>,
    return
  }
  func.func @transform_0(%arg0: i32) -> (i32, i32, i32) {
    %c0_i32 = arith.constant 0 : i32
    %c0_i32_0 = arith.constant 0 : i32
    %c0_i32_1 = arith.constant 0 : i32
    return %arg0, %c0_i32, %c0_i32_0 : i32, i32, i32
  }
  func.func @transform_1(%arg0: i32) -> (i32, i32, i32) {
    %c0_i32 = arith.constant 0 : i32
    %c0_i32_0 = arith.constant 0 : i32
    %c0_i32_1 = arith.constant 0 : i32
    %c0_i32_2 = arith.constant 0 : i32
    return %c0_i32, %c0_i32_0, %c0_i32_1 : i32, i32, i32
  }
  func.func @transform_2(%arg0: i32) -> (i32, i32, i32) {
    %c0_i32 = arith.constant 0 : i32
    %c0_i32_0 = arith.constant 0 : i32
    %c0_i32_1 = arith.constant 0 : i32
    %c0_i32_2 = arith.constant 0 : i32
    return %c0_i32, %c0_i32_0, %c0_i32_1 : i32, i32, i32
  }
  func.func @transform_3(%arg0: i32) -> (i32, i32, i32) {
    %c0_i32 = arith.constant 0 : i32
    %c0_i32_0 = arith.constant 0 : i32
    %c0_i32_1 = arith.constant 0 : i32
    %c0_i32_2 = arith.constant 0 : i32
    return %c0_i32, %c0_i32_0, %c0_i32_1 : i32, i32, i32
  }
  func.func @transform_4(%arg0: i32) -> (i32, i32, i32) {
    %c0_i32 = arith.constant 0 : i32
    %c0_i32_0 = arith.constant 0 : i32
    %c0_i32_1 = arith.constant 0 : i32
    %c0_i32_2 = arith.constant 0 : i32
    return %c0_i32, %c0_i32_0, %c0_i32_1 : i32, i32, i32
  }
  func.func @transform_5(%arg0: i32) -> (i32, i32, i32) {
    %c0_i32 = arith.constant 0 : i32
    %c0_i32_0 = arith.constant 0 : i32
    %c0_i32_1 = arith.constant 0 : i32
    return %arg0, %c0_i32, %c0_i32_0 : i32, i32, i32
  }
}

</mosaic_0001>

<llo_original>
// kernel: mam_ma.1
$region0: #{mam_ma.1}
  #allocation0 [shape = 'u32[]', space=smem, size = 0x4, offset = 0x4, fixed_abs, tag = 'smem constant byte address 0x4 - core index']
  #allocation1 [shape = 'u32[72,128]{1,0:T(1,128)}', space=vmem, size = 0x9000, scoped, tag = 'internal scratch']
  %s0 = inlined_call_operand.hbm [shape: f32[16,16,32], index: 0, kind: input, shape index: {}]
  %s1 = inlined_call_operand.vmem [shape: f32[2,16,16], index: 1, kind: input, shape index: {}]
  %s2 = inlined_call_operand.vmem [shape: f32[2,1,16], index: 2, kind: input, shape index: {}]
  %s3 = inlined_call_operand.vmem [shape: f32[2,32,32], index: 3, kind: input, shape index: {}]
  %s4 = inlined_call_operand.vmem [shape: f32[2,1,32], index: 4, kind: input, shape index: {}]
  %s5 = inlined_call_operand.hbm [shape: f32[16,16,32], index: 5, kind: output, shape index: {}]
  %s6 = sld [smem:[#allocation0]]
  $region57: #{mam_ma.1} parent=0
    _
  %s8 = ssub.s32 1, %s6
  %s9 = scalar_select 0, %s8, %s6
  $region1: #{mam_ma.1} parent=0
    #allocation2 [shape = 'u8[131072]{0}', space=vmem, size = 0x20000, scoped, tag = 'input window, operand 0']
    #allocation3 [shape = 's32[2]{0}', space=sflag, size = 0x8, scoped, tag = 'scoped memory for mam_ma.1']
    #allocation4 [shape = 's32[2]{0}', space=sflag, size = 0x8, scoped, tag = 'scoped memory for mam_ma.1']
    #allocation5 [shape = 'u8[131072]{0}', space=vmem, size = 0x20000, scoped, tag = 'output window, operand 0']
    %10 = vsyncpa [#allocation3], 0
    %s11 = scalar_lea.sflag [#allocation3], 1
    %12 = vsyncpa %s11, 0
    %13 = vsyncpa [#allocation4], 0
    %s14 = scalar_lea.sflag [#allocation4], 1
    %15 = vsyncpa %s14, 0
    loop: start=0, step=1, limit=4
    $region2: #{mam_ma.1} parent=1 // loop_pre_header
      _
    $region3: #{mam_ma.1} parent=1 // loop_header
      %s17 = sphi 0, %s21
      %p18 = scmp.ge.s32.totalorder %s17, 4
      %s27 = sphi 0, %s29
      %s30 = sphi 0, %s27
      %s31 = sphi 0, %s30
      %s47 = sphi 0, %s31
      %s51 = sphi 0, %s51
      %s53 = sphi 0, %s51
      %s54 = sphi 0, %s53
      %s68 = sphi 0, %s54
      %s72 = sphi 0, %s72
      %s74 = sphi 0, %s72
      %s75 = sphi 0, %s74
      %s89 = sphi 0, %s75
      %s93 = sphi 0, %s93
      %s95 = sphi 0, %s93
      %s96 = sphi 0, %s95
      %s110 = sphi 0, %s96
      %s114 = sphi 0, %s114
      %s116 = sphi 0, %s114
      %s117 = sphi 0, %s116
      %s131 = sphi 0, %s117
      %s137 = sphi 0, %s139
      %s140 = sphi 0, %s137
      %s141 = sphi 0, %s140
      %s157 = sphi 0, %s141
    $region4: #{mam_ma.1} parent=1 // loop_header_branch
      %20 = sbr.rel (%p18) target = $region8
    $region5: #{mam_ma.1} parent=1 // loop_body
      %s22 = ssub.s32 %s17, 1
      %s23 = ssub.s32 %s17, 2
      %s24 = sadd.s32 %s17, 1
      %s25 = ssub.s32 %s17, %s24
      %p26 = scmp.eq.s32.totalorder %s25, 0
      %s28 = sadd.s32 %s27, 1
      %s29 = scalar_select %p26, %s27, %s28
      %p32 = pneg %p26
      %p33 = scmp.eq.s32.totalorder %s17, 1
      %p34 = por %p32, %p33
      %p35 = scmp.ne.s32.totalorder %s27, %s30
      %p36 = scmp.eq.s32.totalorder %s17, 0
      %p37 = por %p35, %p36
      %p38 = scmp.ne.s32.totalorder %s27, %s30
      %p39 = scmp.eq.s32.totalorder %s22, 1
      %p40 = por %p38, %p39
      %p41 = scmp.ne.s32.totalorder %s30, %s31
      %p42 = scmp.eq.s32.totalorder %s22, 0
      %p43 = por %p41, %p42
      %p44 = scmp.ne.s32.totalorder %s30, %s31
      %p45 = scmp.eq.s32.totalorder %s23, 1
      %p46 = por %p44, %p45
      %p48 = scmp.ne.s32.totalorder %s31, %s47
      %p49 = scmp.eq.s32.totalorder %s23, 0
      %p50 = por %p48, %p49
      %s52 = sadd.s32 %s51, 1
      %p55 = scmp.eq.s32.totalorder %s17, 1
      %p56 = scmp.ne.s32.totalorder %s51, %s53
      %p57 = scmp.eq.s32.totalorder %s17, 0
      %p58 = por %p56, %p57
      %p59 = scmp.ne.s32.totalorder %s51, %s53
      %p60 = scmp.eq.s32.totalorder %s22, 1
      %p61 = por %p59, %p60
      %p62 = scmp.ne.s32.totalorder %s53, %s54
      %p63 = scmp.eq.s32.totalorder %s22, 0
      %p64 = por %p62, %p63
      %p65 = scmp.ne.s32.totalorder %s53, %s54
      %p66 = scmp.eq.s32.totalorder %s23, 1
      %p67 = por %p65, %p66
      %p69 = scmp.ne.s32.totalorder %s54, %s68
      %p70 = scmp.eq.s32.totalorder %s23, 0
      %p71 = por %p69, %p70
      %s73 = sadd.s32 %s72, 1
      %p76 = scmp.eq.s32.totalorder %s17, 1
      %p77 = scmp.ne.s32.totalorder %s72, %s74
      %p78 = scmp.eq.s32.totalorder %s17, 0
      %p79 = por %p77, %p78
      %p80 = scmp.ne.s32.totalorder %s72, %s74
      %p81 = scmp.eq.s32.totalorder %s22, 1
      %p82 = por %p80, %p81
      %p83 = scmp.ne.s32.totalorder %s74, %s75
      %p84 = scmp.eq.s32.totalorder %s22, 0
      %p85 = por %p83, %p84
      %p86 = scmp.ne.s32.totalorder %s74, %s75
      %p87 = scmp.eq.s32.totalorder %s23, 1
      %p88 = por %p86, %p87
      %p90 = scmp.ne.s32.totalorder %s75, %s89
      %p91 = scmp.eq.s32.totalorder %s23, 0
      %p92 = por %p90, %p91
      %s94 = sadd.s32 %s93, 1
      %p97 = scmp.eq.s32.totalorder %s17, 1
      %p98 = scmp.ne.s32.totalorder %s93, %s95
      %p99 = scmp.eq.s32.totalorder %s17, 0
      %p100 = por %p98, %p99
      %p101 = scmp.ne.s32.totalorder %s93, %s95
      %p102 = scmp.eq.s32.totalorder %s22, 1
      %p103 = por %p101, %p102
      %p104 = scmp.ne.s32.totalorder %s95, %s96
      %p105 = scmp.eq.s32.totalorder %s22, 0
      %p106 = por %p104, %p105
      %p107 = scmp.ne.s32.totalorder %s95, %s96
      %p108 = scmp.eq.s32.totalorder %s23, 1
      %p109 = por %p107, %p108
      %p111 = scmp.ne.s32.totalorder %s96, %s110
      %p112 = scmp.eq.s32.totalorder %s23, 0
      %p113 = por %p111, %p112
      %s115 = sadd.s32 %s114, 1
      %p118 = scmp.eq.s32.totalorder %s17, 1
      %p119 = scmp.ne.s32.totalorder %s114, %s116
      %p120 = scmp.eq.s32.totalorder %s17, 0
      %p121 = por %p119, %p120
      %p122 = scmp.ne.s32.totalorder %s114, %s116
      %p123 = scmp.eq.s32.totalorder %s22, 1
      %p124 = por %p122, %p123
      %p125 = scmp.ne.s32.totalorder %s116, %s117
      %p126 = scmp.eq.s32.totalorder %s22, 0
      %p127 = por %p125, %p126
      %p128 = scmp.ne.s32.totalorder %s116, %s117
      %p129 = scmp.eq.s32.totalorder %s23, 1
      %p130 = por %p128, %p129
      %p132 = scmp.ne.s32.totalorder %s117, %s131
      %p133 = scmp.eq.s32.totalorder %s23, 0
      %p134 = por %p132, %p133
      %s135 = ssub.s32 %s17, %s24
      %p136 = scmp.eq.s32.totalorder %s135, 0
      %s138 = sadd.s32 %s137, 1
      %s139 = scalar_select %p136, %s137, %s138
      %p142 = pneg %p136
      %p143 = scmp.eq.s32.totalorder %s17, 1
      %p144 = por %p142, %p143
      %p145 = scmp.ne.s32.totalorder %s137, %s140
      %p146 = scmp.eq.s32.totalorder %s17, 0
      %p147 = por %p145, %p146
      %p148 = scmp.ne.s32.totalorder %s137, %s140
      %p149 = scmp.eq.s32.totalorder %s22, 1
      %p150 = por %p148, %p149
      %p151 = scmp.ne.s32.totalorder %s140, %s141
      %p152 = scmp.eq.s32.totalorder %s22, 0
      %p153 = por %p151, %p152
      %p154 = scmp.ne.s32.totalorder %s140, %s141
      %p155 = scmp.eq.s32.totalorder %s23, 1
      %p156 = por %p154, %p155
      %p158 = scmp.ne.s32.totalorder %s141, %s157
      %p159 = scmp.eq.s32.totalorder %s23, 0
      %p160 = por %p158, %p159
      %p161 = scmp.le.s32.totalorder 1, %s17
      %p162 = scmp.lt.s32.totalorder %s17, 3
      %p163 = pnand %p161, %p162
      %p164 = pneg %p163
      // Predicated region
      $region9: #{mam_ma.1} parent=5 // pred_check
        _
      $region10: #{mam_ma.1} parent=5 // pred_check_branch
        %166 = sbr.rel (%p163) target = $region12
      $region11: #{mam_ma.1} parent=5 // pred_region
        %s167 = ssub.s32 %s17, 1
        // Predicated region
        $region13: #{mam_ma.1} parent=11 // pred_check
          %p168 = pneg %p64
        $region14: #{mam_ma.1} parent=11 // pred_check_branch
          %170 = sbr.rel (%p168) target = $region16
        $region15: #{mam_ma.1} parent=11 // pred_region
          _
        $region16: #{mam_ma.1} parent=11 // pred_fallthru
          _
        // Predicated region
        $region17: #{mam_ma.1} parent=11 // pred_check
          %p171 = pneg %p85
        $region18: #{mam_ma.1} parent=11 // pred_check_branch
          %173 = sbr.rel (%p171) target = $region20
        $region19: #{mam_ma.1} parent=11 // pred_region
          _
        $region20: #{mam_ma.1} parent=11 // pred_fallthru
          _
        // Predicated region
        $region21: #{mam_ma.1} parent=11 // pred_check
          %p174 = pneg %p106
        $region22: #{mam_ma.1} parent=11 // pred_check_branch
          %176 = sbr.rel (%p174) target = $region24
        $region23: #{mam_ma.1} parent=11 // pred_region
          _
        $region24: #{mam_ma.1} parent=11 // pred_fallthru
          _
        // Predicated region
        $region25: #{mam_ma.1} parent=11 // pred_check
          %p177 = pneg %p127
        $region26: #{mam_ma.1} parent=11 // pred_check_branch
          %179 = sbr.rel (%p177) target = $region28
        $region27: #{mam_ma.1} parent=11 // pred_region
          _
        $region28: #{mam_ma.1} parent=11 // pred_fallthru
          _
      $region12: #{mam_ma.1} parent=5 // pred_fallthru
        _
      %p180 = scmp.lt.s32.totalorder %s17, 2
      // Predicated region
      $region29: #{mam_ma.1} parent=5 // pred_check
        %p181 = pneg %p180
      $region30: #{mam_ma.1} parent=5 // pred_check_branch
        %183 = sbr.rel (%p181) target = $region32
      $region31: #{mam_ma.1} parent=5 // pred_region
        // Predicated region
        $region33: #{mam_ma.1} parent=31 // pred_check
          %p184 = pneg %p37
        $region34: #{mam_ma.1} parent=31 // pred_check_branch
          %186 = sbr.rel (%p184) target = $region36
        $region35: #{mam_ma.1} parent=31 // pred_region
          %s187 = sand.u32 %s27, 1
          %s188 = scalar_lea.sflag [#allocation3], %s187
          %s189 = sand.u32 %s27, 1
          %s190 = smul.addr %s189, 128
          %s191 = scalar_lea.vmem [#allocation2], %s190
          %s192 = smul.u32 8, %s17
          %194 = vsyncadd %s188, 0
          %s195 = smul.addr %s192, 2
          %s196 = smul.addr %s195, 8
          %s197 = scalar_lea.hbm %s0, %s196
          %s198 = sshll.u32 %s197, 4
          %s199 = int_to_ptr.hbm [resolvable:$true] %s198
          %s200 = sshll.u32 %s191, 4
          %s201 = int_to_ptr.vmem [resolvable:$true] %s200
          %206 = dma.hbm_to_vmem [thread:$0]  %s199, 2048, %s201, %s188, 128, 128, 8
        $region36: #{mam_ma.1} parent=31 // pred_fallthru
          _
      $region32: #{mam_ma.1} parent=5 // pred_fallthru
        _
      %p207 = scmp.le.s32.totalorder 1, %s17
      %p208 = scmp.lt.s32.totalorder %s17, 3
      %p209 = pnand %p207, %p208
      %p210 = pneg %p209
      // Predicated region
      $region37: #{mam_ma.1} parent=5 // pred_check
        _
      $region38: #{mam_ma.1} parent=5 // pred_check_branch
        %212 = sbr.rel (%p209) target = $region40
      $region39: #{mam_ma.1} parent=5 // pred_region
        %s213 = ssub.s32 %s17, 1
        %s214 = sand.u32 %s30, 1
        %s215 = scalar_lea.sflag [#allocation3], %s214
        %s216 = sand.u32 %s30, 1
        %s217 = smul.addr %s216, 128
        %s218 = scalar_lea.vmem [#allocation2], %s217
        // Predicated region
        $region41: #{mam_ma.1} parent=39 // pred_check
          %p219 = pneg %p43
        $region42: #{mam_ma.1} parent=39 // pred_check_branch
          %221 = sbr.rel (%p219) target = $region44
        $region43: #{mam_ma.1} parent=39 // pred_region
          %223 = dma.done %s215, 2048
        $region44: #{mam_ma.1} parent=39 // pred_fallthru
          _
        %s224 = sand.u32 %s30, 1
        %s225 = scalar_lea.sflag [#allocation3], %s224
        %s226 = sand.u32 %s30, 1
        %s227 = smul.addr %s226, 128
        %s228 = scalar_lea.vmem [#allocation2], %s227
        %p229 = pneg %p43
        %p230 = pneg %p40
        %p231 = pneg %p64
        %p232 = pneg %p61
        %p233 = pneg %p85
        %p234 = pneg %p82
        %p235 = pneg %p106
        %p236 = pneg %p103
        %p237 = pneg %p127
        %p238 = pneg %p124
        %p239 = pneg %p153
        %p240 = pneg %p150
        %s241 = sand.u32 %s140, 1
        %s242 = scalar_lea.sflag [#allocation4], %s241
        %s243 = sand.u32 %s140, 1
        %s244 = smul.addr %s243, 128
        %s245 = scalar_lea.vmem [#allocation5], %s244
        %s246 = smul.u32 8, %s22
        %s247 = smul.u32 8, %s22
        %v248 = vld [vmem:[%s218] sm:$0xff]
        %v249 = vld [vmem:[%s218 + $0x8] sm:$0xff]
        %v250 = vld [vmem:[%s218 + $0x10] sm:$0xff]
        %v251 = vld [vmem:[%s218 + $0x18] sm:$0xff]
        %v252 = vld [vmem:[%s218 + $0x20] sm:$0xff]
        %v253 = vld [vmem:[%s218 + $0x28] sm:$0xff]
        %v254 = vld [vmem:[%s218 + $0x30] sm:$0xff]
        %v255 = vld [vmem:[%s218 + $0x38] sm:$0xff]
        %v256 = vld [vmem:[%s218 + $0x40] sm:$0xff]
        %v257 = vld [vmem:[%s218 + $0x48] sm:$0xff]
        %v258 = vld [vmem:[%s218 + $0x50] sm:$0xff]
        %v259 = vld [vmem:[%s218 + $0x58] sm:$0xff]
        %v260 = vld [vmem:[%s218 + $0x60] sm:$0xff]
        %v261 = vld [vmem:[%s218 + $0x68] sm:$0xff]
        %v262 = vld [vmem:[%s218 + $0x70] sm:$0xff]
        %v263 = vld [vmem:[%s218 + $0x78] sm:$0xff]
        %vm264 = vcmask 261120
        %v265 = vsel %vm264, %v248, 0.0
        %266 = vadd.xlane.f32.xlu0 %v265
        %v267 = vpop.xlane.xlu0 %266
        %v268 = vsel %vm264, %v249, 0.0
        %269 = vadd.xlane.f32.xlu0 %v268
        %v270 = vpop.xlane.xlu0 %269
        %v271 = vsel %vm264, %v250, 0.0
        %272 = vadd.xlane.f32.xlu0 %v271
        %v273 = vpop.xlane.xlu0 %272
        %v274 = vsel %vm264, %v251, 0.0
        %275 = vadd.xlane.f32.xlu0 %v274
        %v276 = vpop.xlane.xlu0 %275
        %v277 = vsel %vm264, %v252, 0.0
        %278 = vadd.xlane.f32.xlu0 %v277
        %v279 = vpop.xlane.xlu0 %278
        %v280 = vsel %vm264, %v253, 0.0
        %281 = vadd.xlane.f32.xlu0 %v280
        %v282 = vpop.xlane.xlu0 %281
        %v283 = vsel %vm264, %v254, 0.0
        %284 = vadd.xlane.f32.xlu0 %v283
        %v285 = vpop.xlane.xlu0 %284
        %v286 = vsel %vm264, %v255, 0.0
        %287 = vadd.xlane.f32.xlu0 %v286
        %v288 = vpop.xlane.xlu0 %287
        %v289 = vsel %vm264, %v256, 0.0
        %290 = vadd.xlane.f32.xlu0 %v289
        %v291 = vpop.xlane.xlu0 %290
        %v292 = vsel %vm264, %v257, 0.0
        %293 = vadd.xlane.f32.xlu0 %v292
        %v294 = vpop.xlane.xlu0 %293
        %v295 = vsel %vm264, %v258, 0.0
        %296 = vadd.xlane.f32.xlu0 %v295
        %v297 = vpop.xlane.xlu0 %296
        %v298 = vsel %vm264, %v259, 0.0
        %299 = vadd.xlane.f32.xlu0 %v298
        %v300 = vpop.xlane.xlu0 %299
        %v301 = vsel %vm264, %v260, 0.0
        %302 = vadd.xlane.f32.xlu0 %v301
        %v303 = vpop.xlane.xlu0 %302
        %v304 = vsel %vm264, %v261, 0.0
        %305 = vadd.xlane.f32.xlu0 %v304
        %v306 = vpop.xlane.xlu0 %305
        %v307 = vsel %vm264, %v262, 0.0
        %308 = vadd.xlane.f32.xlu0 %v307
        %v309 = vpop.xlane.xlu0 %308
        %v310 = vsel %vm264, %v263, 0.0
        %311 = vadd.xlane.f32.xlu0 %v310
        %v312 = vpop.xlane.xlu0 %311
        %v313 = vrcp.pop 32.0
        %v314 = vmul.f32 32.0, %v313
        %v315 = vsub.f32 1.0, %v314
        %v316 = vmul.f32 %v313, %v315
        %v317 = vadd.f32 %v313, %v316
        %vm318 = vweird.f32 %v313
        %v319 = vsel %vm318, %v313, %v317
        %v320 = vmul.f32 %v267, %v319
        %v321 = vmul.f32 %v270, %v319
        %v322 = vmul.f32 %v273, %v319
        %v323 = vmul.f32 %v276, %v319
        %v324 = vmul.f32 %v279, %v319
        %v325 = vmul.f32 %v282, %v319
        %v326 = vmul.f32 %v285, %v319
        %v327 = vmul.f32 %v288, %v319
        %v328 = vmul.f32 %v291, %v319
        %v329 = vmul.f32 %v294, %v319
        %v330 = vmul.f32 %v297, %v319
        %v331 = vmul.f32 %v300, %v319
        %v332 = vmul.f32 %v303, %v319
        %v333 = vmul.f32 %v306, %v319
        %v334 = vmul.f32 %v309, %v319
        %v335 = vmul.f32 %v312, %v319
        %v336 = vsel %vm264, %v248, -inf
        %337 = vmax.xlane.f32.xlu0 %v336
        %v338 = vpop.xlane.xlu0 %337
        %v339 = vsel %vm264, %v249, -inf
        %340 = vmax.xlane.f32.xlu0 %v339
        %v341 = vpop.xlane.xlu0 %340
        %v342 = vsel %vm264, %v250, -inf
        %343 = vmax.xlane.f32.xlu0 %v342
        %v344 = vpop.xlane.xlu0 %343
        %v345 = vsel %vm264, %v251, -inf
        %346 = vmax.xlane.f32.xlu0 %v345
        %v347 = vpop.xlane.xlu0 %346
        %v348 = vsel %vm264, %v252, -inf
        %349 = vmax.xlane.f32.xlu0 %v348
        %v350 = vpop.xlane.xlu0 %349
        %v351 = vsel %vm264, %v253, -inf
        %352 = vmax.xlane.f32.xlu0 %v351
        %v353 = vpop.xlane.xlu0 %352
        %v354 = vsel %vm264, %v254, -inf
        %355 = vmax.xlane.f32.xlu0 %v354
        %v356 = vpop.xlane.xlu0 %355
        %v357 = vsel %vm264, %v255, -inf
        %358 = vmax.xlane.f32.xlu0 %v357
        %v359 = vpop.xlane.xlu0 %358
        %v360 = vsel %vm264, %v256, -inf
        %361 = vmax.xlane.f32.xlu0 %v360
        %v362 = vpop.xlane.xlu0 %361
        %v363 = vsel %vm264, %v257, -inf
        %364 = vmax.xlane.f32.xlu0 %v363
        %v365 = vpop.xlane.xlu0 %364
        %v366 = vsel %vm264, %v258, -inf
        %367 = vmax.xlane.f32.xlu0 %v366
        %v368 = vpop.xlane.xlu0 %367
        %v369 = vsel %vm264, %v259, -inf
        %370 = vmax.xlane.f32.xlu0 %v369
        %v371 = vpop.xlane.xlu0 %370
        %v372 = vsel %vm264, %v260, -inf
        %373 = vmax.xlane.f32.xlu0 %v372
        %v374 = vpop.xlane.xlu0 %373
        %v375 = vsel %vm264, %v261, -inf
        %376 = vmax.xlane.f32.xlu0 %v375
        %v377 = vpop.xlane.xlu0 %376
        %v378 = vsel %vm264, %v262, -inf
        %379 = vmax.xlane.f32.xlu0 %v378
        %v380 = vpop.xlane.xlu0 %379
        %v381 = vsel %vm264, %v263, -inf
        %382 = vmax.xlane.f32.xlu0 %v381
        %v383 = vpop.xlane.xlu0 %382
        %v384 = vld [vmem:[%s1] sm:$0xff]
        %v385 = vld [vmem:[%s1 + $0x8] sm:$0xff]
        %v386 = vld [vmem:[%s2] sm:$0x1]
        %v388 = vperm.slane %v386, 0
        %v406 = vlaneseq
        %v407 = vand.u32 %v406, 127
        %v408 = vperm.slane %v320, %v407
        %v409 = vadd.s32 %v407, 4294967288
        %v410 = vperm.slane %v321, %v409
        %vm411 = vcmask 130112
        %v412 = vsel %vm411, %v410, %v408
        %v413 = vperm.slane %v322, %v407
        %v414 = vperm.slane %v323, %v409
        %v415 = vsel %vm411, %v414, %v413
        %v416 = vperm.slane %v324, %v407
        %v417 = vperm.slane %v325, %v409
        %v418 = vsel %vm411, %v417, %v416
        %v419 = vperm.slane %v326, %v407
        %v420 = vperm.slane %v327, %v409
        %v421 = vsel %vm411, %v420, %v419
        %v422 = vperm.slane %v328, %v407
        %v423 = vperm.slane %v329, %v409
        %v424 = vsel %vm411, %v423, %v422
        %v425 = vperm.slane %v330, %v407
        %v426 = vperm.slane %v331, %v409
        %v427 = vsel %vm411, %v426, %v425
        %v428 = vperm.slane %v332, %v407
        %v429 = vperm.slane %v333, %v409
        %v430 = vsel %vm411, %v429, %v428
        %v431 = vperm.slane %v334, %v407
        %v432 = vperm.slane %v335, %v409
        %v433 = vsel %vm411, %v432, %v431
        %vm434 = vcmask 1041409
        %v435 = vsel %vm434, %v415, %v412
        %vm436 = vcmask 1042434
        %v437 = vsel %vm436, %v418, %v435
        %vm438 = vcmask 1043459
        %v439 = vsel %vm438, %v421, %v437
        %vm440 = vcmask 1044484
        %v441 = vsel %vm440, %v424, %v439
        %vm442 = vcmask 1045509
        %v443 = vsel %vm442, %v427, %v441
        %vm444 = vcmask 1046534
        %v445 = vsel %vm444, %v430, %v443
        %vm446 = vcmask 1047559
        %v447 = vsel %vm446, %v433, %v445
        %vm448 = vcmask 130048
        %v449 = vsel %vm448, %v447, 0
        %451 = vmatpush.msra.mxu0 0.0
        %452 = vmatpush.msra.mxu0 0.0
        %453 = vmatpush.msra.mxu0 0.0
        %454 = vmatpush.msra.mxu0 0.0
        %455 = vmatpush.msra.mxu0 0.0
        %456 = vmatpush.msra.mxu0 0.0
        %457 = vmatpush.msra.mxu0 0.0
        %458 = vmatpush.msra.mxu0 0.0
        %459 = vmatpush.msra.mxu0 0.0
        %460 = vmatpush.msra.mxu0 0.0
        %461 = vmatpush.msra.mxu0 0.0
        %462 = vmatpush.msra.mxu0 0.0
        %463 = vmatpush.msra.mxu0 0.0
        %464 = vmatpush.msra.mxu0 0.0
        %465 = vmatpush.msra.mxu0 %v385
        %466 = vmatpush.msra.mxu0 %v384
        %467 = vmatmul.f32.gmra.mxu0 %v449
        %v468 = vpop.f32.mrf.mxu0
        %v469 = vadd.f32 %v388, %v468
        %470 = vdwg.mxu0
        %s471 = scalar_lea.vmem %s1, 16
        %v472 = vld [vmem:[%s471] sm:$0xff]
        %v473 = vld [vmem:[%s471 + $0x8] sm:$0xff]
        %s474 = scalar_lea.vmem %s2, 1
        %v475 = vld [vmem:[%s474] sm:$0x1]
        %v477 = vperm.slane %v475, 0
        %v495 = vperm.slane %v338, %v407
        %v496 = vperm.slane %v341, %v409
        %v497 = vsel %vm411, %v496, %v495
        %v498 = vperm.slane %v344, %v407
        %v499 = vperm.slane %v347, %v409
        %v500 = vsel %vm411, %v499, %v498
        %v501 = vperm.slane %v350, %v407
        %v502 = vperm.slane %v353, %v409
        %v503 = vsel %vm411, %v502, %v501
        %v504 = vperm.slane %v356, %v407
        %v505 = vperm.slane %v359, %v409
        %v506 = vsel %vm411, %v505, %v504
        %v507 = vperm.slane %v362, %v407
        %v508 = vperm.slane %v365, %v409
        %v509 = vsel %vm411, %v508, %v507
        %v510 = vperm.slane %v368, %v407
        %v511 = vperm.slane %v371, %v409
        %v512 = vsel %vm411, %v511, %v510
        %v513 = vperm.slane %v374, %v407
        %v514 = vperm.slane %v377, %v409
        %v515 = vsel %vm411, %v514, %v513
        %v516 = vperm.slane %v380, %v407
        %v517 = vperm.slane %v383, %v409
        %v518 = vsel %vm411, %v517, %v516
        %v519 = vsel %vm434, %v500, %v497
        %v520 = vsel %vm436, %v503, %v519
        %v521 = vsel %vm438, %v506, %v520
        %v522 = vsel %vm440, %v509, %v521
        %v523 = vsel %vm442, %v512, %v522
        %v524 = vsel %vm444, %v515, %v523
        %v525 = vsel %vm446, %v518, %v524
        %v526 = vsel %vm448, %v525, 0
        %528 = vmatpush.msra.mxu0 0.0
        %529 = vmatpush.msra.mxu0 0.0
        %530 = vmatpush.msra.mxu0 0.0
        %531 = vmatpush.msra.mxu0 0.0
        %532 = vmatpush.msra.mxu0 0.0
        %533 = vmatpush.msra.mxu0 0.0
        %534 = vmatpush.msra.mxu0 0.0
        %535 = vmatpush.msra.mxu0 0.0
        %536 = vmatpush.msra.mxu0 0.0
        %537 = vmatpush.msra.mxu0 0.0
        %538 = vmatpush.msra.mxu0 0.0
        %539 = vmatpush.msra.mxu0 0.0
        %540 = vmatpush.msra.mxu0 0.0
        %541 = vmatpush.msra.mxu0 0.0
        %542 = vmatpush.msra.mxu0 %v473
        %543 = vmatpush.msra.mxu0 %v472
        %544 = vmatmul.f32.gmra.mxu0 %v526
        %v545 = vpop.f32.mrf.mxu0
        %v546 = vadd.f32 %v477, %v545
        %547 = vdwg.mxu0
        %v548 = vmax.f32 %v469, 0.0
        %v549 = vmax.f32 %v546, 0.0
        %v550 = vadd.f32 %v548, %v549
        %v551 = vxor.u32 %v550, 2147483648
        %v552 = vmul.f32 %v551, 1.442695
        %v553 = vpow.pop %v552
        %v554 = vadd.f32 %v553, 1.0
        %v555 = vrcp.pop %v554
        %v556 = vmul.f32 %v554, %v555
        %v557 = vsub.f32 1.0, %v556
        %v558 = vmul.f32 %v555, %v557
        %v559 = vadd.f32 %v555, %v558
        %vm560 = vweird.f32 %v554
        %vm561 = vweird.f32 %v555
        %vm562 = vmor %vm560, %vm561
        %v563 = vsel %vm562, %v555, %v559
        %v564 = vand.u32 2147483647, %v554
        %vm565 = vcmp.eq.f32.partialorder %v564, 8.507059e+37
        %v566 = vand.u32 %v554, 2147483648
        %v567 = vor.u32 1.1754944e-38, %v566
        %v568 = vsel %vm565, %v567, %v563
        %v569 = vmul.f32 1.0, %v568
        %v570 = vperm.slane %v569, 0
        %v571 = vlaneseq
        %v572 = vshrl.u32 %v571, 7
        %574 = vset.pattern.permute.xlu0 %v572
        %575 = vperm.xlu0 %574, %v570
        %v576 = vpop.permute.xlu0 %575
        %v577 = vlaneseq
        %v578 = vshrl.u32 %v577, 7
        %v579 = vadd.s32 %v578, 8
        %580 = vset.pattern.permute.xlu0 %v579
        %581 = vperm.xlu0 %580, %v570
        %v582 = vpop.permute.xlu0 %581
        %v583 = vperm.slane %v569, 1
        %v584 = vlaneseq
        %v585 = vshrl.u32 %v584, 7
        %587 = vset.pattern.permute.xlu0 %v585
        %588 = vperm.xlu0 %587, %v583
        %v589 = vpop.permute.xlu0 %588
        %v590 = vlaneseq
        %v591 = vshrl.u32 %v590, 7
        %v592 = vadd.s32 %v591, 8
        %593 = vset.pattern.permute.xlu0 %v592
        %594 = vperm.xlu0 %593, %v583
        %v595 = vpop.permute.xlu0 %594
        %v596 = vperm.slane %v569, 2
        %v597 = vlaneseq
        %v598 = vshrl.u32 %v597, 7
        %600 = vset.pattern.permute.xlu0 %v598
        %601 = vperm.xlu0 %600, %v596
        %v602 = vpop.permute.xlu0 %601
        %v603 = vlaneseq
        %v604 = vshrl.u32 %v603, 7
        %v605 = vadd.s32 %v604, 8
        %606 = vset.pattern.permute.xlu0 %v605
        %607 = vperm.xlu0 %606, %v596
        %v608 = vpop.permute.xlu0 %607
        %v609 = vperm.slane %v569, 3
        %v610 = vlaneseq
        %v611 = vshrl.u32 %v610, 7
        %613 = vset.pattern.permute.xlu0 %v611
        %614 = vperm.xlu0 %613, %v609
        %v615 = vpop.permute.xlu0 %614
        %v616 = vlaneseq
        %v617 = vshrl.u32 %v616, 7
        %v618 = vadd.s32 %v617, 8
        %619 = vset.pattern.permute.xlu0 %v618
        %620 = vperm.xlu0 %619, %v609
        %v621 = vpop.permute.xlu0 %620
        %v622 = vperm.slane %v569, 4
        %v623 = vlaneseq
        %v624 = vshrl.u32 %v623, 7
        %626 = vset.pattern.permute.xlu0 %v624
        %627 = vperm.xlu0 %626, %v622
        %v628 = vpop.permute.xlu0 %627
        %v629 = vlaneseq
        %v630 = vshrl.u32 %v629, 7
        %v631 = vadd.s32 %v630, 8
        %632 = vset.pattern.permute.xlu0 %v631
        %633 = vperm.xlu0 %632, %v622
        %v634 = vpop.permute.xlu0 %633
        %v635 = vperm.slane %v569, 5
        %v636 = vlaneseq
        %v637 = vshrl.u32 %v636, 7
        %639 = vset.pattern.permute.xlu0 %v637
        %640 = vperm.xlu0 %639, %v635
        %v641 = vpop.permute.xlu0 %640
        %v642 = vlaneseq
        %v643 = vshrl.u32 %v642, 7
        %v644 = vadd.s32 %v643, 8
        %645 = vset.pattern.permute.xlu0 %v644
        %646 = vperm.xlu0 %645, %v635
        %v647 = vpop.permute.xlu0 %646
        %v648 = vperm.slane %v569, 6
        %v649 = vlaneseq
        %v650 = vshrl.u32 %v649, 7
        %652 = vset.pattern.permute.xlu0 %v650
        %653 = vperm.xlu0 %652, %v648
        %v654 = vpop.permute.xlu0 %653
        %v655 = vlaneseq
        %v656 = vshrl.u32 %v655, 7
        %v657 = vadd.s32 %v656, 8
        %658 = vset.pattern.permute.xlu0 %v657
        %659 = vperm.xlu0 %658, %v648
        %v660 = vpop.permute.xlu0 %659
        %v661 = vperm.slane %v569, 7
        %v662 = vlaneseq
        %v663 = vshrl.u32 %v662, 7
        %665 = vset.pattern.permute.xlu0 %v663
        %666 = vperm.xlu0 %665, %v661
        %v667 = vpop.permute.xlu0 %666
        %v668 = vlaneseq
        %v669 = vshrl.u32 %v668, 7
        %v670 = vadd.s32 %v669, 8
        %671 = vset.pattern.permute.xlu0 %v670
        %672 = vperm.xlu0 %671, %v661
        %v673 = vpop.permute.xlu0 %672
        %v674 = vmul.f32 %v248, %v576
        %v675 = vmul.f32 %v249, %v582
        %v676 = vmul.f32 %v250, %v589
        %v677 = vmul.f32 %v251, %v595
        %v678 = vmul.f32 %v252, %v602
        %v679 = vmul.f32 %v253, %v608
        %v680 = vmul.f32 %v254, %v615
        %v681 = vmul.f32 %v255, %v621
        %v682 = vmul.f32 %v256, %v628
        %v683 = vmul.f32 %v257, %v634
        %v684 = vmul.f32 %v258, %v641
        %v685 = vmul.f32 %v259, %v647
        %v686 = vmul.f32 %v260, %v654
        %v687 = vmul.f32 %v261, %v660
        %v688 = vmul.f32 %v262, %v667
        %v689 = vmul.f32 %v263, %v673
        %v690 = vsel %vm264, %v674, 0.0
        %v691 = vsel %vm264, %v675, 0.0
        %v692 = vadd.f32 %v690, %v691
        %v693 = vrot.slane %v692, 4
        %v694 = vadd.f32 %v692, %v693
        %v695 = vrot.slane %v694, 2
        %v696 = vadd.f32 %v694, %v695
        %v697 = vrot.slane %v696, 1
        %v698 = vadd.f32 %v696, %v697
        %v699 = vsel %vm264, %v676, 0.0
        %v700 = vsel %vm264, %v677, 0.0
        %v701 = vadd.f32 %v699, %v700
        %v702 = vrot.slane %v701, 4
        %v703 = vadd.f32 %v701, %v702
        %v704 = vrot.slane %v703, 2
        %v705 = vadd.f32 %v703, %v704
        %v706 = vrot.slane %v705, 1
        %v707 = vadd.f32 %v705, %v706
        %v708 = vsel %vm264, %v678, 0.0
        %v709 = vsel %vm264, %v679, 0.0
        %v710 = vadd.f32 %v708, %v709
        %v711 = vrot.slane %v710, 4
        %v712 = vadd.f32 %v710, %v711
        %v713 = vrot.slane %v712, 2
        %v714 = vadd.f32 %v712, %v713
        %v715 = vrot.slane %v714, 1
        %v716 = vadd.f32 %v714, %v715
        %v717 = vsel %vm264, %v680, 0.0
        %v718 = vsel %vm264, %v681, 0.0
        %v719 = vadd.f32 %v717, %v718
        %v720 = vrot.slane %v719, 4
        %v721 = vadd.f32 %v719, %v720
        %v722 = vrot.slane %v721, 2
        %v723 = vadd.f32 %v721, %v722
        %v724 = vrot.slane %v723, 1
        %v725 = vadd.f32 %v723, %v724
        %v726 = vsel %vm264, %v682, 0.0
        %v727 = vsel %vm264, %v683, 0.0
        %v728 = vadd.f32 %v726, %v727
        %v729 = vrot.slane %v728, 4
        %v730 = vadd.f32 %v728, %v729
        %v731 = vrot.slane %v730, 2
        %v732 = vadd.f32 %v730, %v731
        %v733 = vrot.slane %v732, 1
        %v734 = vadd.f32 %v732, %v733
        %v735 = vsel %vm264, %v684, 0.0
        %v736 = vsel %vm264, %v685, 0.0
        %v737 = vadd.f32 %v735, %v736
        %v738 = vrot.slane %v737, 4
        %v739 = vadd.f32 %v737, %v738
        %v740 = vrot.slane %v739, 2
        %v741 = vadd.f32 %v739, %v740
        %v742 = vrot.slane %v741, 1
        %v743 = vadd.f32 %v741, %v742
        %v744 = vsel %vm264, %v686, 0.0
        %v745 = vsel %vm264, %v687, 0.0
        %v746 = vadd.f32 %v744, %v745
        %v747 = vrot.slane %v746, 4
        %v748 = vadd.f32 %v746, %v747
        %v749 = vrot.slane %v748, 2
        %v750 = vadd.f32 %v748, %v749
        %v751 = vrot.slane %v750, 1
        %v752 = vadd.f32 %v750, %v751
        %v753 = vsel %vm264, %v688, 0.0
        %v754 = vsel %vm264, %v689, 0.0
        %v755 = vadd.f32 %v753, %v754
        %v756 = vrot.slane %v755, 4
        %v757 = vadd.f32 %v755, %v756
        %v758 = vrot.slane %v757, 2
        %v759 = vadd.f32 %v757, %v758
        %v760 = vrot.slane %v759, 1
        %v761 = vadd.f32 %v759, %v760
        %v762 = vrcp.pop 16.0
        %v763 = vmul.f32 16.0, %v762
        %v764 = vsub.f32 1.0, %v763
        %v765 = vmul.f32 %v762, %v764
        %v766 = vadd.f32 %v762, %v765
        %vm767 = vweird.f32 %v762
        %v768 = vsel %vm767, %v762, %v766
        %v769 = vmul.f32 %v698, %v768
        %v770 = vmul.f32 %v707, %v768
        %v771 = vmul.f32 %v716, %v768
        %v772 = vmul.f32 %v725, %v768
        %v773 = vmul.f32 %v734, %v768
        %v774 = vmul.f32 %v743, %v768
        %v775 = vmul.f32 %v752, %v768
        %v776 = vmul.f32 %v761, %v768
        %v777 = vsel %vm264, %v674, -inf
        %v778 = vsel %vm264, %v675, -inf
        %v779 = vmax.f32 %v777, %v778
        %v780 = vrot.slane %v779, 4
        %v781 = vmax.f32 %v779, %v780
        %v782 = vrot.slane %v781, 2
        %v783 = vmax.f32 %v781, %v782
        %v784 = vrot.slane %v783, 1
        %v785 = vmax.f32 %v783, %v784
        %v786 = vsel %vm264, %v676, -inf
        %v787 = vsel %vm264, %v677, -inf
        %v788 = vmax.f32 %v786, %v787
        %v789 = vrot.slane %v788, 4
        %v790 = vmax.f32 %v788, %v789
        %v791 = vrot.slane %v790, 2
        %v792 = vmax.f32 %v790, %v791
        %v793 = vrot.slane %v792, 1
        %v794 = vmax.f32 %v792, %v793
        %v795 = vsel %vm264, %v678, -inf
        %v796 = vsel %vm264, %v679, -inf
        %v797 = vmax.f32 %v795, %v796
        %v798 = vrot.slane %v797, 4
        %v799 = vmax.f32 %v797, %v798
        %v800 = vrot.slane %v799, 2
        %v801 = vmax.f32 %v799, %v800
        %v802 = vrot.slane %v801, 1
        %v803 = vmax.f32 %v801, %v802
        %v804 = vsel %vm264, %v680, -inf
        %v805 = vsel %vm264, %v681, -inf
        %v806 = vmax.f32 %v804, %v805
        %v807 = vrot.slane %v806, 4
        %v808 = vmax.f32 %v806, %v807
        %v809 = vrot.slane %v808, 2
        %v810 = vmax.f32 %v808, %v809
        %v811 = vrot.slane %v810, 1
        %v812 = vmax.f32 %v810, %v811
        %v813 = vsel %vm264, %v682, -inf
        %v814 = vsel %vm264, %v683, -inf
        %v815 = vmax.f32 %v813, %v814
        %v816 = vrot.slane %v815, 4
        %v817 = vmax.f32 %v815, %v816
        %v818 = vrot.slane %v817, 2
        %v819 = vmax.f32 %v817, %v818
        %v820 = vrot.slane %v819, 1
        %v821 = vmax.f32 %v819, %v820
        %v822 = vsel %vm264, %v684, -inf
        %v823 = vsel %vm264, %v685, -inf
        %v824 = vmax.f32 %v822, %v823
        %v825 = vrot.slane %v824, 4
        %v826 = vmax.f32 %v824, %v825
        %v827 = vrot.slane %v826, 2
        %v828 = vmax.f32 %v826, %v827
        %v829 = vrot.slane %v828, 1
        %v830 = vmax.f32 %v828, %v829
        %v831 = vsel %vm264, %v686, -inf
        %v832 = vsel %vm264, %v687, -inf
        %v833 = vmax.f32 %v831, %v832
        %v834 = vrot.slane %v833, 4
        %v835 = vmax.f32 %v833, %v834
        %v836 = vrot.slane %v835, 2
        %v837 = vmax.f32 %v835, %v836
        %v838 = vrot.slane %v837, 1
        %v839 = vmax.f32 %v837, %v838
        %v840 = vsel %vm264, %v688, -inf
        %v841 = vsel %vm264, %v689, -inf
        %v842 = vmax.f32 %v840, %v841
        %v843 = vrot.slane %v842, 4
        %v844 = vmax.f32 %v842, %v843
        %v845 = vrot.slane %v844, 2
        %v846 = vmax.f32 %v844, %v845
        %v847 = vrot.slane %v846, 1
        %v848 = vmax.f32 %v846, %v847
        %v849 = vld [vmem:[%s3] sm:$0xff]
        %v850 = vld [vmem:[%s3 + $0x8] sm:$0xff]
        %v851 = vld [vmem:[%s3 + $0x10] sm:$0xff]
        %v852 = vld [vmem:[%s3 + $0x18] sm:$0xff]
        %v853 = vld [vmem:[%s4] sm:$0x1]
        %v855 = vperm.slane %v853, 0
        %v865 = vsel %vm434, %v770, %v769
        %v866 = vsel %vm436, %v771, %v865
        %v867 = vsel %vm438, %v772, %v866
        %v868 = vsel %vm440, %v773, %v867
        %v869 = vsel %vm442, %v774, %v868
        %v870 = vsel %vm444, %v775, %v869
        %v871 = vsel %vm446, %v776, %v870
        %v872 = vsel %vm264, %v871, 0
        %874 = vmatpush.msra.mxu0 0.0
        %875 = vmatpush.msra.mxu0 0.0
        %876 = vmatpush.msra.mxu0 0.0
        %877 = vmatpush.msra.mxu0 0.0
        %878 = vmatpush.msra.mxu0 0.0
        %879 = vmatpush.msra.mxu0 0.0
        %880 = vmatpush.msra.mxu0 0.0
        %881 = vmatpush.msra.mxu0 0.0
        %882 = vmatpush.msra.mxu0 0.0
        %883 = vmatpush.msra.mxu0 0.0
        %884 = vmatpush.msra.mxu0 0.0
        %885 = vmatpush.msra.mxu0 0.0
        %886 = vmatpush.msra.mxu0 %v852
        %887 = vmatpush.msra.mxu0 %v851
        %888 = vmatpush.msra.mxu0 %v850
        %889 = vmatpush.msra.mxu0 %v849
        %890 = vmatmul.f32.gmra.mxu0 %v872
        %v891 = vpop.f32.mrf.mxu0
        %v892 = vadd.f32 %v855, %v891
        %893 = vdwg.mxu0
        %s894 = scalar_lea.vmem %s3, 32
        %v895 = vld [vmem:[%s894] sm:$0xff]
        %v896 = vld [vmem:[%s894 + $0x8] sm:$0xff]
        %v897 = vld [vmem:[%s894 + $0x10] sm:$0xff]
        %v898 = vld [vmem:[%s894 + $0x18] sm:$0xff]
        %s899 = scalar_lea.vmem %s4, 1
        %v900 = vld [vmem:[%s899] sm:$0x1]
        %v902 = vperm.slane %v900, 0
        %v912 = vsel %vm434, %v794, %v785
        %v913 = vsel %vm436, %v803, %v912
        %v914 = vsel %vm438, %v812, %v913
        %v915 = vsel %vm440, %v821, %v914
        %v916 = vsel %vm442, %v830, %v915
        %v917 = vsel %vm444, %v839, %v916
        %v918 = vsel %vm446, %v848, %v917
        %v919 = vsel %vm264, %v918, 0
        %921 = vmatpush.msra.mxu0 0.0
        %922 = vmatpush.msra.mxu0 0.0
        %923 = vmatpush.msra.mxu0 0.0
        %924 = vmatpush.msra.mxu0 0.0
        %925 = vmatpush.msra.mxu0 0.0
        %926 = vmatpush.msra.mxu0 0.0
        %927 = vmatpush.msra.mxu0 0.0
        %928 = vmatpush.msra.mxu0 0.0
        %929 = vmatpush.msra.mxu0 0.0
        %930 = vmatpush.msra.mxu0 0.0
        %931 = vmatpush.msra.mxu0 0.0
        %932 = vmatpush.msra.mxu0 0.0
        %933 = vmatpush.msra.mxu0 %v898
        %934 = vmatpush.msra.mxu0 %v897
        %935 = vmatpush.msra.mxu0 %v896
        %936 = vmatpush.msra.mxu0 %v895
        %937 = vmatmul.f32.gmra.mxu0 %v919
        %v938 = vpop.f32.mrf.mxu0
        %v939 = vadd.f32 %v902, %v938
        %940 = vdwg.mxu0
        %v941 = vmax.f32 %v892, 0.0
        %v942 = vmax.f32 %v939, 0.0
        %v943 = vadd.f32 %v941, %v942
        %v944 = vxor.u32 %v943, 2147483648
        %v945 = vmul.f32 %v944, 1.442695
        %v946 = vpow.pop %v945
        %v947 = vadd.f32 %v946, 1.0
        %v948 = vrcp.pop %v947
        %v949 = vmul.f32 %v947, %v948
        %v950 = vsub.f32 1.0, %v949
        %v951 = vmul.f32 %v948, %v950
        %v952 = vadd.f32 %v948, %v951
        %vm953 = vweird.f32 %v947
        %vm954 = vweird.f32 %v948
        %vm955 = vmor %vm953, %vm954
        %v956 = vsel %vm955, %v948, %v952
        %v957 = vand.u32 2147483647, %v947
        %vm958 = vcmp.eq.f32.partialorder %v957, 8.507059e+37
        %v959 = vand.u32 %v947, 2147483648
        %v960 = vor.u32 1.1754944e-38, %v959
        %v961 = vsel %vm958, %v960, %v956
        %v962 = vmul.f32 1.0, %v961
        %v964 = vrot.slane %v962, 1
        %v965 = vrot.slane %v962, 2
        %v966 = vrot.slane %v962, 3
        %v967 = vrot.slane %v962, 4
        %v968 = vrot.slane %v962, 5
        %v969 = vrot.slane %v962, 6
        %v970 = vrot.slane %v962, 7
        %v971 = vperm.slane %v962, 0
        %v972 = vperm.slane %v964, 0
        %v973 = vperm.slane %v965, 0
        %v974 = vperm.slane %v966, 0
        %v975 = vperm.slane %v967, 0
        %v976 = vperm.slane %v968, 0
        %v977 = vperm.slane %v969, 0
        %v978 = vperm.slane %v970, 0
        %v987 = vmul.f32 %v674, %v971
        %v988 = vmul.f32 %v675, %v971
        %v989 = vmul.f32 %v676, %v972
        %v990 = vmul.f32 %v677, %v972
        %v991 = vmul.f32 %v678, %v973
        %v992 = vmul.f32 %v679, %v973
        %v993 = vmul.f32 %v680, %v974
        %v994 = vmul.f32 %v681, %v974
        %v995 = vmul.f32 %v682, %v975
        %v996 = vmul.f32 %v683, %v975
        %v997 = vmul.f32 %v684, %v976
        %v998 = vmul.f32 %v685, %v976
        %v999 = vmul.f32 %v686, %v977
        %v1000 = vmul.f32 %v687, %v977
        %v1001 = vmul.f32 %v688, %v978
        %v1002 = vmul.f32 %v689, %v978
        %1003 = vst.msk [vmem:[%s245] sm:$0xff] %vm264, %v987
        %1004 = vst.msk [vmem:[%s245 + $0x8] sm:$0xff] %vm264, %v988
        %1005 = vst.msk [vmem:[%s245 + $0x10] sm:$0xff] %vm264, %v989
        %1006 = vst.msk [vmem:[%s245 + $0x18] sm:$0xff] %vm264, %v990
        %1007 = vst.msk [vmem:[%s245 + $0x20] sm:$0xff] %vm264, %v991
        %1008 = vst.msk [vmem:[%s245 + $0x28] sm:$0xff] %vm264, %v992
        %1009 = vst.msk [vmem:[%s245 + $0x30] sm:$0xff] %vm264, %v993
        %1010 = vst.msk [vmem:[%s245 + $0x38] sm:$0xff] %vm264, %v994
        %1011 = vst.msk [vmem:[%s245 + $0x40] sm:$0xff] %vm264, %v995
        %1012 = vst.msk [vmem:[%s245 + $0x48] sm:$0xff] %vm264, %v996
        %1013 = vst.msk [vmem:[%s245 + $0x50] sm:$0xff] %vm264, %v997
        %1014 = vst.msk [vmem:[%s245 + $0x58] sm:$0xff] %vm264, %v998
        %1015 = vst.msk [vmem:[%s245 + $0x60] sm:$0xff] %vm264, %v999
        %1016 = vst.msk [vmem:[%s245 + $0x68] sm:$0xff] %vm264, %v1000
        %1017 = vst.msk [vmem:[%s245 + $0x70] sm:$0xff] %vm264, %v1001
        %1018 = vst.msk [vmem:[%s245 + $0x78] sm:$0xff] %vm264, %v1002
        %s1019 = sand.u32 %s140, 1
        %s1020 = scalar_lea.sflag [#allocation4], %s1019
        %s1021 = sand.u32 %s140, 1
        %s1022 = smul.addr %s1021, 128
        %s1023 = scalar_lea.vmem [#allocation5], %s1022
        // Predicated region
        $region45: #{mam_ma.1} parent=39 // pred_check
          %p1024 = pneg %p150
        $region46: #{mam_ma.1} parent=39 // pred_check_branch
          %1026 = sbr.rel (%p1024) target = $region48
        $region47: #{mam_ma.1} parent=39 // pred_region
          %s1027 = smul.u32 8, %s22
          %1029 = vsyncadd %s1020, 0
          %s1030 = smul.addr %s1027, 2
          %s1031 = smul.addr %s1030, 8
          %s1032 = scalar_lea.hbm %s5, %s1031
          %s1033 = sshll.u32 %s1023, 4
          %s1034 = int_to_ptr.vmem [resolvable:$true] %s1033
          %s1035 = sshll.u32 %s1032, 4
          %s1036 = int_to_ptr.hbm [resolvable:$true] %s1035
          %1041 = dma.vmem_to_hbm [thread:$0]  %s1034, 2048, %s1036, %s1020, 128, 128, 8
        $region48: #{mam_ma.1} parent=39 // pred_fallthru
          _
      $region40: #{mam_ma.1} parent=5 // pred_fallthru
        _
      %p1042 = scmp.le.s32.totalorder 2, %s17
      // Predicated region
      $region49: #{mam_ma.1} parent=5 // pred_check
        %p1043 = pneg %p1042
      $region50: #{mam_ma.1} parent=5 // pred_check_branch
        %1045 = sbr.rel (%p1043) target = $region52
      $region51: #{mam_ma.1} parent=5 // pred_region
        %s1046 = ssub.s32 %s17, 2
        // Predicated region
        $region53: #{mam_ma.1} parent=51 // pred_check
          %p1047 = pneg %p156
        $region54: #{mam_ma.1} parent=51 // pred_check_branch
          %1049 = sbr.rel (%p1047) target = $region56
        $region55: #{mam_ma.1} parent=51 // pred_region
          %s1050 = sand.u32 %s141, 1
          %s1051 = scalar_lea.sflag [#allocation4], %s1050
          %s1052 = sand.u32 %s141, 1
          %s1053 = smul.addr %s1052, 128
          %s1054 = scalar_lea.vmem [#allocation5], %s1053
          %1056 = dma.done %s1051, 2048
        $region56: #{mam_ma.1} parent=51 // pred_fallthru
          _
      $region52: #{mam_ma.1} parent=5 // pred_fallthru
        _
    $region6: #{mam_ma.1} parent=1 // loop_footer
      %s21 = sadd.s32 1, %s17
    $region7: #{mam_ma.1} parent=1 // loop_footer_branch
      %16 = sbr.rel target = $region3
    $region8: #{mam_ma.1} parent=1 // loop_exit
      _
    %1057 = vsyncpa [#allocation3], 1
    %s1058 = scalar_lea.sflag [#allocation3], 1
    %1059 = vsyncpa %s1058, 1
    %1060 = vsyncpa [#allocation4], 1
    %s1061 = scalar_lea.sflag [#allocation4], 1
    %1062 = vsyncpa %s1061, 1

</llo_original>
